<compile_context>
chip_gen: v6e
topology: v6e:2x2x1
jax: 0.10.0
libtpu: 0.0.40
codegen_flags: <defaults>
</compile_context>

<pallas_src>
import functools

import jax
import jax.numpy as jnp
from jax.experimental import pallas as pl
from jax.experimental.pallas import tpu as pltpu


def _round_up(a, b):
    return (a + b - 1) // b * b


def _cdiv(a, b):
    return (a + b - 1) // b


def _vmem_limit_bytes():
    """Generation-aware scoped-VMEM limit (v5e/v6e: 128 MiB phys, v7x: 64 MiB)."""
    cap = 64 * 1024 * 1024
    try:
        cap = int(pltpu.get_tpu_info().vmem_capacity_bytes)
    except Exception:
        pass
    return max(32 * 1024 * 1024, min(100 * 1024 * 1024, (cap * 3) // 4))


def _choose_rows(r, cap=256):
    """Rows-per-block (multiple of 8, <=cap) and in-kernel row-group size (<=32)."""
    r = max(int(r), 1)
    if r <= 32:
        rb = _round_up(r, 8)
        return rb, rb
    return min(_round_up(r, 32), cap), 32


# ---------------------------------------------------------------------------
# Kernel 1: per-row (row = one (n, c) pair) sum / sum-of-squares.
#   x block:   (Rb, Lb)   (Rb multiple of 8, Lb multiple of 128)
#   outputs:   (Rb, 1)    written once, at the last L block (in-kernel lane reduce)
#   scratch:   2 x (Rb, 128) f32 lane-wide accumulators, resident across L.
# ---------------------------------------------------------------------------
def _stats_kernel(x_ref, sum_ref, sq_ref, acc_s, acc_q, *,
                  rb, rg, lb, l_total, n_l_blocks, full_chunks, tail_chunks, ragged):
    li = pl.program_id(1)

    @pl.when(li == 0)
    def _():
        acc_s[...] = jnp.zeros_like(acc_s)
        acc_q[...] = jnp.zeros_like(acc_q)

    last_base = (n_l_blocks - 1) * lb     # lane offset of the last L block (static)
    sub = 8                               # 128-lane chunks per inner pl.loop step

    def accum_chunks(r0, chunk0, n, masked):
        # n, r0 static; chunk0 may be traced.  Local vreg accumulators -> a single
        # read-modify-write of the VMEM accumulator per call (ld/st slots stay free).
        s = jnp.zeros((rg, 128), jnp.float32)
        q = jnp.zeros((rg, 128), jnp.float32)
        for k in range(n):
            start = (chunk0 + k) * 128
            if not isinstance(start, int):
                start = pl.multiple_of(start, 128)
            xc = x_ref[pl.ds(r0, rg), pl.ds(start, 128)].astype(jnp.float32)
            if masked:
                lane = jax.lax.broadcasted_iota(jnp.int32, (1, 128), 1)
                xc = jnp.where(last_base + start + lane < l_total, xc, 0.0)
            s = s + xc
            q = q + xc * xc
        acc_s[pl.ds(r0, rg), :] += s
        acc_q[pl.ds(r0, rg), :] += q

    def process_block(n_chunks, masked):
        n_super, rem = divmod(n_chunks, sub)
        for g in range(rb // rg):          # static row groups of rg rows
            r0 = g * rg
            if n_super > 0:
                @pl.loop(0, n_super)
                def _(t, r0=r0, masked=masked):
                    accum_chunks(r0, t * sub, sub, masked)
            if rem > 0:
                accum_chunks(r0, n_super * sub, rem, masked)

    if ragged and n_l_blocks > 1:
        # Only the last L block pays the lane mask.
        @pl.when(li < n_l_blocks - 1)
        def _():
            process_block(full_chunks, masked=False)

        @pl.when(li == n_l_blocks - 1)
        def _():
            process_block(tail_chunks, masked=True)
    elif ragged:
        process_block(tail_chunks, masked=True)
    else:
        process_block(full_chunks, masked=False)

    # Finalize: 128 -> 1 lane reduction on the (idle) XLU, tiny (Rb, 1) writeback.
    @pl.when(li == n_l_blocks - 1)
    def _():
        sum_ref[...] = jnp.sum(acc_s[...], axis=1, keepdims=True)
        sq_ref[...] = jnp.sum(acc_q[...], axis=1, keepdims=True)


# ---------------------------------------------------------------------------
# Kernel 2: fused normalize + affine + activation (elementwise hot path).
#   x/o block: (Rb, Lb); per-row scale/shift: (Rb, 1), lane-broadcast.
# ---------------------------------------------------------------------------
def _norm_act_kernel(x_ref, scale_ref, shift_ref, o_ref, *,
                     activation, act_param, compute_dtype):
    x = x_ref[...].astype(compute_dtype)
    y = x * scale_ref[...].astype(compute_dtype) + shift_ref[...].astype(compute_dtype)
    if activation == "leaky_relu":
        y = jnp.where(y >= 0, y, act_param * y)
    elif activation == "relu":
        y = jnp.maximum(y, 0)
    elif activation == "elu":
        # exp clamped at 0 so ragged/OOB garbage lanes can't produce inf/nan.
        y = jnp.where(y >= 0, y, act_param * (jnp.exp(jnp.minimum(y, 0.0)) - 1.0))
    elif activation == "identity":
        pass
    else:
        raise ValueError(f"unsupported activation: {activation}")
    o_ref[...] = y.astype(o_ref.dtype)


# ---------------------------------------------------------------------------
# Wrapper
# ---------------------------------------------------------------------------
def abn_forward(
    x_nchw,
    weight,
    bias,
    running_mean,
    running_var,
    *,
    eps=1e-5,
    momentum=0.1,
    activation="leaky_relu",
    activation_param=0.01,
):
    """ABN forward (training mode). Returns (y_nchw, new_running_mean, new_running_var)."""
    N, C, H, W = x_nchw.shape
    L = H * W
    R = N * C
    count = float(N * L)
    itemsize = jnp.dtype(x_nchw.dtype).itemsize

    # Free reshape: NCHW -> (N*C, L).  Rows land on sublanes, H*W on lanes.
    x2 = x_nchw.reshape(R, L)

    vmem_limit = _vmem_limit_bytes()
    target = vmem_limit // 6              # ~16 MiB on v5e/v6e, ~8 MiB on v7x
    L_pad = _round_up(L, 128)
    R_pad = _round_up(R, 8)

    # ------------------- pass 1: per-row sum / sum-of-squares -------------------
    rb1, rg1 = _choose_rows(R)
    nr1 = _cdiv(R, rb1)
    if nr1 == 1 and R >= 16:
        # Split rows so both TensorCores get pass-1 work on 2-TC chips (v7x);
        # harmless (one extra grid boundary) on single-TC chips.
        rb1, rg1 = _choose_rows(_cdiv(R, 2))
        nr1 = _cdiv(R, rb1)
    lb1 = min(L_pad, max(128, (target // (rb1 * itemsize)) // 128 * 128))
    nl1 = _cdiv(L, lb1)
    ragged = (L % lb1) != 0
    full_chunks = lb1 // 128
    tail_chunks = _cdiv(L - (nl1 - 1) * lb1, 128)

    stats_fn = functools.partial(
        _stats_kernel, rb=rb1, rg=rg1, lb=lb1, l_total=L, n_l_blocks=nl1,
        full_chunks=full_chunks, tail_chunks=tail_chunks, ragged=ragged)

    sums, sqs = pl.pallas_call(
        stats_fn,
        out_shape=(
            jax.ShapeDtypeStruct((R, 1), jnp.float32),
            jax.ShapeDtypeStruct((R, 1), jnp.float32),
        ),
        grid_spec=pltpu.PrefetchScalarGridSpec(
            num_scalar_prefetch=0,
            grid=(nr1, nl1),
            in_specs=[pl.BlockSpec((rb1, lb1), lambda r, l: (r, l))],
            out_specs=[
                pl.BlockSpec((rb1, 1), lambda r, l: (r, 0)),
                pl.BlockSpec((rb1, 1), lambda r, l: (r, 0)),
            ],
            scratch_shapes=[
                pltpu.VMEM((rb1, 128), jnp.float32),
                pltpu.VMEM((rb1, 128), jnp.float32),
            ],
        ),
        compiler_params=pltpu.CompilerParams(
            dimension_semantics=("parallel", "arbitrary"),
            vmem_limit_bytes=vmem_limit,
        ),
    )(x2)

    # Tiny glue: finish the (N, C) reduction, fold BN into per-row scale/shift.
    sum_c = jnp.sum(sums.reshape(N, C), axis=0)      # (C,)
    sq_c = jnp.sum(sqs.reshape(N, C), axis=0)        # (C,)
    mean = sum_c / count
    var_biased = jnp.maximum(sq_c / count - mean * mean, 0.0)

    w32 = jnp.ones((C,), jnp.float32) if weight is None else weight.astype(jnp.float32)
    b32 = jnp.zeros((C,), jnp.float32) if bias is None else bias.astype(jnp.float32)
    inv_std = jax.lax.rsqrt(var_biased + eps)
    scale_c = w32 * inv_std
    shift_c = b32 - mean * scale_c
    scale_r = jnp.broadcast_to(scale_c[None, :], (N, C)).reshape(R, 1)
    shift_r = jnp.broadcast_to(shift_c[None, :], (N, C)).reshape(R, 1)

    # ---------------- pass 2: fused normalize + affine + activation ----------------
    lb2 = min(L_pad, max(128, (target // (8 * itemsize)) // 128 * 128))
    rb2 = min(R_pad, max(8, (target // (lb2 * itemsize)) // 8 * 8))
    nr2 = _cdiv(R, rb2)
    nl2 = _cdiv(L, lb2)
    if nr2 * nl2 == 1 and L_pad >= 256:
        # Give 2-TC chips at least two independent blocks.
        lb2 = _round_up(_cdiv(L_pad, 2), 128)
        nl2 = _cdiv(L, lb2)

    # bf16 math on bf16 inputs (native VPU bf16 on v6e/v7x); f32 otherwise.
    compute_dtype = jnp.bfloat16 if x_nchw.dtype == jnp.bfloat16 else jnp.float32
    norm_fn = functools.partial(
        _norm_act_kernel, activation=activation,
        act_param=float(activation_param), compute_dtype=compute_dtype)

    y2 = pl.pallas_call(
        norm_fn,
        out_shape=jax.ShapeDtypeStruct((R, L), x_nchw.dtype),
        grid_spec=pltpu.PrefetchScalarGridSpec(
            num_scalar_prefetch=0,
            grid=(nr2, nl2),
            in_specs=[
                pl.BlockSpec((rb2, lb2), lambda r, l: (r, l)),
                pl.BlockSpec((rb2, 1), lambda r, l: (r, 0)),
                pl.BlockSpec((rb2, 1), lambda r, l: (r, 0)),
            ],
            out_specs=pl.BlockSpec((rb2, lb2), lambda r, l: (r, l)),
        ),
        compiler_params=pltpu.CompilerParams(
            dimension_semantics=("parallel", "parallel"),
            vmem_limit_bytes=vmem_limit,
        ),
    )(x2, scale_r, shift_r)

    y = y2.reshape(N, C, H, W)                       # free reshape back to NCHW

    # Running-stat buffer update (training-mode side effect), preserving buffer dtype.
    var_unbiased = var_biased * (count / max(count - 1.0, 1.0))
    new_running_mean = ((1.0 - momentum) * running_mean.astype(jnp.float32)
                        + momentum * mean).astype(running_mean.dtype)
    new_running_var = ((1.0 - momentum) * running_var.astype(jnp.float32)
                       + momentum * var_unbiased).astype(running_var.dtype)

    return y, new_running_mean, new_running_var


if __name__ == "__main__":
    key = jax.random.PRNGKey(0)
    N, C, H, W = 2, 4, 16, 16
    x = jax.random.normal(key, (N, C, H, W), dtype=jnp.float32)

    # Deterministic parameter init, matching ABN.reset_parameters():
    weight = jnp.ones((C,), jnp.float32)
    bias = jnp.zeros((C,), jnp.float32)
    running_mean = jnp.zeros((C,), jnp.float32)
    running_var = jnp.ones((C,), jnp.float32)

    eps = 1e-5
    momentum = 0.1
    activation_param = 0.01  # leaky_relu negative slope

    y, rm, rv = abn_forward(
        x, weight, bias, running_mean, running_var,
        eps=eps, momentum=momentum,
        activation="leaky_relu", activation_param=activation_param,
    )
    jax.block_until_ready(y)
    jax.block_until_ready(rm)
    jax.block_until_ready(rv)

    # Pure-JAX reference (training-mode batch norm + leaky_relu).
    mean_ref = jnp.mean(x, axis=(0, 2, 3))
    var_ref = jnp.var(x, axis=(0, 2, 3))
    xn = (x - mean_ref[None, :, None, None]) / jnp.sqrt(var_ref[None, :, None, None] + eps)
    xn = xn * weight[None, :, None, None] + bias[None, :, None, None]
    y_ref = jnp.where(xn >= 0, xn, activation_param * xn)

    M = N * H * W
    var_unb_ref = var_ref * (M / (M - 1))
    rm_ref = (1.0 - momentum) * running_mean + momentum * mean_ref
    rv_ref = (1.0 - momentum) * running_var + momentum * var_unb_ref

    assert jnp.allclose(y, y_ref, atol=1e-4, rtol=1e-4), "output mismatch vs reference"
    assert jnp.allclose(rm, rm_ref, atol=1e-5, rtol=1e-5), "running_mean mismatch"
    assert jnp.allclose(rv, rv_ref, atol=1e-5, rtol=1e-5), "running_var mismatch"

    print("KERNEL_OK")
</pallas_src>

<mosaic_0001>
module attributes {stable_mosaic.version = 11 : i64} {
  func.func @_stats_kernel(%arg0: i32, %arg1: i32, %arg2: memref<8x256xf32, #tpu.memory_space<vmem>>, %arg3: memref<8x1xf32, #tpu.memory_space<vmem>>, %arg4: memref<8x1xf32, #tpu.memory_space<vmem>>, %arg5: memref<8x128xf32, #tpu.memory_space<vmem>>, %arg6: memref<8x128xf32, #tpu.memory_space<vmem>>) attributes {dimension_semantics = [#tpu.dimension_semantics<parallel>, #tpu.dimension_semantics<arbitrary>], iteration_bounds = array<i64: 1, 1>, scalar_prefetch = 0 : i64, scratch_operands = 2 : i64, tpu.core_type = #tpu.core_type<tc>, window_params = [{transform_indices = @transform_0, window_bounds = array<i64: 8, 256>}, {transform_indices = @transform_1, window_bounds = array<i64: 8, 1>}, {transform_indices = @transform_2, window_bounds = array<i64: 8, 1>}]} {
    %c0_i32 = arith.constant 0 : i32
    %0 = arith.cmpi eq, %arg1, %c0_i32 : i32
    %1 = arith.extui %0 : i1 to i32
    %c0_i32_0 = arith.constant 0 : i32
    %2 = arith.cmpi ne, %1, %c0_i32_0 : i32
    scf.if %2 {
      %cst_14 = arith.constant 0.000000e+00 : f32
      %22 = vector.broadcast %cst_14 : f32 to vector<8x128xf32>
      %c0_15 = arith.constant 0 : index
      %c0_16 = arith.constant 0 : index
      %23 = vector.load %arg5[%c0_15, %c0_16] : memref<8x128xf32, #tpu.memory_space<vmem>>, vector<8x128xf32>
      tpu.vector_store %arg5[%c0_15, %c0_16], %22 {strides = array<i32>} : memref<8x128xf32, #tpu.memory_space<vmem>>, vector<8x128xf32>,
      %cst_17 = arith.constant 0.000000e+00 : f32
      %24 = vector.broadcast %cst_17 : f32 to vector<8x128xf32>
      %c0_18 = arith.constant 0 : index
      %c0_19 = arith.constant 0 : index
      %25 = vector.load %arg6[%c0_18, %c0_19] : memref<8x128xf32, #tpu.memory_space<vmem>>, vector<8x128xf32>
      tpu.vector_store %arg6[%c0_18, %c0_19], %24 {strides = array<i32>} : memref<8x128xf32, #tpu.memory_space<vmem>>, vector<8x128xf32>,
    } else {
    }
    %cst = arith.constant 0.000000e+00 : f32
    %3 = vector.broadcast %cst : f32 to vector<8x128xf32>
    %cst_1 = arith.constant 0.000000e+00 : f32
    %4 = vector.broadcast %cst_1 : f32 to vector<8x128xf32>
    %c0 = arith.constant 0 : index
    %c0_2 = arith.constant 0 : index
    %5 = vector.load %arg2[%c0, %c0_2] : memref<8x256xf32, #tpu.memory_space<vmem>>, vector<8x128xf32>
    %6 = arith.addf %3, %5 : vector<8x128xf32>
    %7 = arith.mulf %5, %5 : vector<8x128xf32>
    %8 = arith.addf %4, %7 : vector<8x128xf32>
    %c0_3 = arith.constant 0 : index
    %c128 = arith.constant 128 : index
    %9 = vector.load %arg2[%c0_3, %c128] : memref<8x256xf32, #tpu.memory_space<vmem>>, vector<8x128xf32>
    %10 = arith.addf %6, %9 : vector<8x128xf32>
    %11 = arith.mulf %9, %9 : vector<8x128xf32>
    %12 = arith.addf %8, %11 : vector<8x128xf32>
    %c0_4 = arith.constant 0 : index
    %c0_5 = arith.constant 0 : index
    %13 = vector.load %arg5[%c0_4, %c0_5] : memref<8x128xf32, #tpu.memory_space<vmem>>, vector<8x128xf32>
    %14 = arith.addf %13, %10 : vector<8x128xf32>
    %c0_6 = arith.constant 0 : index
    %c0_7 = arith.constant 0 : index
    %15 = vector.load %arg5[%c0_6, %c0_7] : memref<8x128xf32, #tpu.memory_space<vmem>>, vector<8x128xf32>
    tpu.vector_store %arg5[%c0_6, %c0_7], %14 {strides = array<i32>} : memref<8x128xf32, #tpu.memory_space<vmem>>, vector<8x128xf32>,
    %c0_8 = arith.constant 0 : index
    %c0_9 = arith.constant 0 : index
    %16 = vector.load %arg6[%c0_8, %c0_9] : memref<8x128xf32, #tpu.memory_space<vmem>>, vector<8x128xf32>
    %17 = arith.addf %16, %12 : vector<8x128xf32>
    %c0_10 = arith.constant 0 : index
    %c0_11 = arith.constant 0 : index
    %18 = vector.load %arg6[%c0_10, %c0_11] : memref<8x128xf32, #tpu.memory_space<vmem>>, vector<8x128xf32>
    tpu.vector_store %arg6[%c0_10, %c0_11], %17 {strides = array<i32>} : memref<8x128xf32, #tpu.memory_space<vmem>>, vector<8x128xf32>,
    %c0_i32_12 = arith.constant 0 : i32
    %19 = arith.cmpi eq, %arg1, %c0_i32_12 : i32
    %20 = arith.extui %19 : i1 to i32
    %c0_i32_13 = arith.constant 0 : i32
    %21 = arith.cmpi ne, %20, %c0_i32_13 : i32
    scf.if %21 {
      %c0_14 = arith.constant 0 : index
      %c0_15 = arith.constant 0 : index
      %22 = vector.load %arg5[%c0_14, %c0_15] : memref<8x128xf32, #tpu.memory_space<vmem>>, vector<8x128xf32>
      %cst_16 = arith.constant dense<0.000000e+00> : vector<8xf32>
      %23 = vector.multi_reduction <add>, %22, %cst_16 [1] : vector<8x128xf32> to vector<8xf32>
      %24 = vector.shape_cast %23 : vector<8xf32> to vector<8x1xf32>
      %c0_17 = arith.constant 0 : index
      %c0_18 = arith.constant 0 : index
      %25 = vector.load %arg3[%c0_17, %c0_18] : memref<8x1xf32, #tpu.memory_space<vmem>>, vector<8x1xf32>
      tpu.vector_store %arg3[%c0_17, %c0_18], %24 {strides = array<i32>} : memref<8x1xf32, #tpu.memory_space<vmem>>, vector<8x1xf32>,
      %c0_19 = arith.constant 0 : index
      %c0_20 = arith.constant 0 : index
      %26 = vector.load %arg6[%c0_19, %c0_20] : memref<8x128xf32, #tpu.memory_space<vmem>>, vector<8x128xf32>
      %cst_21 = arith.constant dense<0.000000e+00> : vector<8xf32>
      %27 = vector.multi_reduction <add>, %26, %cst_21 [1] : vector<8x128xf32> to vector<8xf32>
      %28 = vector.shape_cast %27 : vector<8xf32> to vector<8x1xf32>
      %c0_22 = arith.constant 0 : index
      %c0_23 = arith.constant 0 : index
      %29 = vector.load %arg4[%c0_22, %c0_23] : memref<8x1xf32, #tpu.memory_space<vmem>>, vector<8x1xf32>
      tpu.vector_store %arg4[%c0_22, %c0_23], %28 {strides = array<i32>} : memref<8x1xf32, #tpu.memory_space<vmem>>, vector<8x1xf32>,
    } else {
    }
    return
  }
  func.func @transform_0(%arg0: i32, %arg1: i32) -> (i32, i32) {
    %c0_i32 = arith.constant 0 : i32
    return %arg0, %arg1 : i32, i32
  }
  func.func @transform_1(%arg0: i32, %arg1: i32) -> (i32, i32) {
    %c0_i32 = arith.constant 0 : i32
    %c0_i32_0 = arith.constant 0 : i32
    return %arg0, %c0_i32 : i32, i32
  }
  func.func @transform_2(%arg0: i32, %arg1: i32) -> (i32, i32) {
    %c0_i32 = arith.constant 0 : i32
    %c0_i32_0 = arith.constant 0 : i32
    return %arg0, %c0_i32 : i32, i32
  }
}

</mosaic_0001>

<llo_original>
// kernel: tpu_custom_call.1
$region0: #{tpu_custom_call.1}
  #allocation0 [shape = 'u32[]', space=smem, size = 0x4, offset = 0x4, fixed_abs, tag = 'smem constant byte address 0x4 - core index']
  #allocation1 [shape = 'u32[144,128]{1,0:T(1,128)}', space=vmem, size = 0x12000, scoped, tag = 'internal scratch']
  #allocation2 [shape = 'f32[8,128]{1,0:T(8,128)}', space=vmem, size = 0x1000, scoped, tag = 'scratch operand']
  #allocation3 [shape = 'f32[8,128]{1,0:T(8,128)}', space=vmem, size = 0x1000, scoped, tag = 'scratch operand']
  %s0 = inlined_call_operand.hbm [shape: f32[8,256], index: 0, kind: input, shape index: {}]
  %s1 = inlined_call_operand.vmem [shape: f32[8,1], index: 1, kind: output, shape index: {0}]
  %s2 = inlined_call_operand.vmem [shape: f32[8,1], index: 2, kind: output, shape index: {1}]
  %3 = xla_tuple %s1, %s2
  %s4 = sld [smem:[#allocation0]]
  $region34: #{tpu_custom_call.1} parent=0
    _
  %s6 = ssub.s32 1, %s4
  %s7 = scalar_select 0, %s6, %s4
  $region1: #{tpu_custom_call.1} parent=0
    #allocation4 [shape = 'u8[8192]{0}', space=vmem, size = 0x2000, scoped, tag = 'input window, operand 0, single buffered']
    #allocation5 [shape = 's32[1]{0}', space=sflag, size = 0x4, scoped, tag = 'scoped memory for tpu_custom_call.1']
    %8 = vsyncpa [#allocation5], 0
    // Predicated region
    $region2: #{tpu_custom_call.1} parent=1 // pred_check
      _
    $region3: #{tpu_custom_call.1} parent=1 // pred_check_branch
      %10 = sbr.rel (0) target = $region5
    $region4: #{tpu_custom_call.1} parent=1 // pred_region
      %s12 = ssub.s32 256, 256
      %13 = vsyncadd [#allocation5], %s12
      %s15 = sshll.u32 [#allocation4], 4
      %s16 = int_to_ptr.vmem [resolvable:$true] %s15
      %18 = dma.hbm_to_vmem [thread:$0]  %s0, 256, %s16, [#allocation5]
    $region5: #{tpu_custom_call.1} parent=1 // pred_fallthru
      _
    // Predicated region
    $region6: #{tpu_custom_call.1} parent=1 // pred_check
      _
    $region7: #{tpu_custom_call.1} parent=1 // pred_check_branch
      %20 = sbr.rel (0) target = $region9
    $region8: #{tpu_custom_call.1} parent=1 // pred_region
      %21 = dma.done [#allocation5], 256
    $region9: #{tpu_custom_call.1} parent=1 // pred_fallthru
      _
    %p22 = scmp.eq.s32.totalorder 0, 0
    // Predicated region
    $region10: #{tpu_custom_call.1} parent=1 // pred_check
      %p23 = pneg %p22
    $region11: #{tpu_custom_call.1} parent=1 // pred_check_branch
      %25 = sbr.rel (%p23) target = $region13
    $region12: #{tpu_custom_call.1} parent=1 // pred_region
      %26 = vst [vmem:[#allocation2] sm:$0xff] 0.0
      %27 = vst [vmem:[#allocation3] sm:$0xff] 0.0
    $region13: #{tpu_custom_call.1} parent=1 // pred_fallthru
      _
    %v28 = vld [vmem:[#allocation4] sm:$0xff]
    %v29 = vadd.f32 %v28, 0.0
    %v30 = vmul.f32 %v28, %v28
    %v31 = vadd.f32 %v30, 0.0
    %v32 = vld [vmem:[#allocation4 + $0x8] sm:$0xff]
    %v33 = vadd.f32 %v29, %v32
    %v34 = vmul.f32 %v32, %v32
    %v35 = vadd.f32 %v31, %v34
    %v36 = vld [vmem:[#allocation2] sm:$0xff]
    %v37 = vadd.f32 %v36, %v33
    %38 = vst [vmem:[#allocation2] sm:$0xff] %v37
    %v39 = vld [vmem:[#allocation3] sm:$0xff]
    %v40 = vadd.f32 %v39, %v35
    %41 = vst [vmem:[#allocation3] sm:$0xff] %v40
    // Predicated region
    $region14: #{tpu_custom_call.1} parent=1 // pred_check
      %p42 = pneg %p22
    $region15: #{tpu_custom_call.1} parent=1 // pred_check_branch
      %44 = sbr.rel (%p42) target = $region17
    $region16: #{tpu_custom_call.1} parent=1 // pred_region
      %v45 = vld [vmem:[#allocation2] sm:$0xff]
      %46 = vadd.xlane.f32.xlu0 %v45
      %v47 = vpop.xlane.xlu0 %46
      %vm48 = vcmask 7168
      %49 = vst.msk [vmem:[%s1] sm:$0xff] %vm48, %v47
      %v50 = vld [vmem:[#allocation3] sm:$0xff]
      %51 = vadd.xlane.f32.xlu0 %v50
      %v52 = vpop.xlane.xlu0 %51
      %53 = vst.msk [vmem:[%s2] sm:$0xff] %vm48, %v52
    $region17: #{tpu_custom_call.1} parent=1 // pred_fallthru
      _
    // Predicated region
    $region18: #{tpu_custom_call.1} parent=1 // pred_check
      _
    $region19: #{tpu_custom_call.1} parent=1 // pred_check_branch
      %55 = sbr.rel (0) target = $region21
    $region20: #{tpu_custom_call.1} parent=1 // pred_region
      _
    $region21: #{tpu_custom_call.1} parent=1 // pred_fallthru
      _
    // Predicated region
    $region22: #{tpu_custom_call.1} parent=1 // pred_check
      _
    $region23: #{tpu_custom_call.1} parent=1 // pred_check_branch
      %57 = sbr.rel (0) target = $region25
    $region24: #{tpu_custom_call.1} parent=1 // pred_region
      _
    $region25: #{tpu_custom_call.1} parent=1 // pred_fallthru
      _
    // Predicated region
    $region26: #{tpu_custom_call.1} parent=1 // pred_check
      _
    $region27: #{tpu_custom_call.1} parent=1 // pred_check_branch
      %59 = sbr.rel (0) target = $region29
    $region28: #{tpu_custom_call.1} parent=1 // pred_region
      _
    $region29: #{tpu_custom_call.1} parent=1 // pred_fallthru
      _
    // Predicated region
    $region30: #{tpu_custom_call.1} parent=1 // pred_check
      _
    $region31: #{tpu_custom_call.1} parent=1 // pred_check_branch
      %61 = sbr.rel (0) target = $region33
    $region32: #{tpu_custom_call.1} parent=1 // pred_region
      _
    $region33: #{tpu_custom_call.1} parent=1 // pred_fallthru
      _
    %62 = vsyncpa [#allocation5], 1

</llo_original>
